<compile_context>
chip_gen: v5e
topology: v5e:2x2
jax: 0.10.0
libtpu: 0.0.40
codegen_flags: <defaults>
</compile_context>

<pallas_src>
import functools

import jax
import jax.numpy as jnp
from jax.experimental import pallas as pl
from jax.experimental.pallas import tpu as pltpu

EPS = 1e-5
_SUBLANE = 8
_LANE = 128


def _round_up(v, m):
    return ((v + m - 1) // m) * m


def _vmem_capacity_bytes():
    """Physical VMEM per TensorCore; conservative fallback if the query fails."""
    try:
        info = pltpu.get_tpu_info()
        for name in ("vmem_capacity_bytes", "vmem_size_bytes", "vmem_bytes"):
            v = getattr(info, name, None)
            if v:
                return int(v)
    except Exception:
        pass
    return 64 * 1024 * 1024  # v7x-class per-TC VMEM; safe on every generation


def _plan_lanes(L, per_lane_f32_bytes, budget_bytes):
    """Lane-dim plan: returns (L_pad, l_tile, n_lt) with l_tile % 128 == 0."""
    L128 = _round_up(L, _LANE)
    cap = max(_LANE, (budget_bytes // max(1, per_lane_f32_bytes)) // _LANE * _LANE)
    if L128 <= cap:
        return L128, L128, 1                      # whole slab resident: x read once
    n_lt = pl.cdiv(L128, cap)
    l_tile = _round_up(pl.cdiv(L128, n_lt), _LANE)
    return n_lt * l_tile, l_tile, n_lt


def _cbn_kernel(params_ref, x_ref, o_ref, sr, si, qr, qi, *,
                inv_cnt, eps, c_blk, l_tile):
    ph = pl.program_id(1)
    lt = pl.program_id(2)

    @pl.when(jnp.logical_and(ph == 0, lt == 0))
    def _init():
        sr[...] = jnp.zeros_like(sr)
        si[...] = jnp.zeros_like(si)
        qr[...] = jnp.zeros_like(qr)
        qi[...] = jnp.zeros_like(qi)

    @pl.when(ph == 0)
    def _reduce():
        xv = x_ref[...].astype(jnp.float32)                  # (B, Cb, Lt)
        xs = jnp.sum(xv, axis=0)                             # (Cb, Lt)
        xq = jnp.sum(xv * xv, axis=0)                        # (Cb, Lt)
        lane = jax.lax.broadcasted_iota(jnp.int32, (c_blk, l_tile), 1)
        is_real = (lane & 1) == 0
        s_all = jnp.sum(xs, axis=1, keepdims=True)           # (Cb, 1)
        q_all = jnp.sum(xq, axis=1, keepdims=True)
        s_re = jnp.sum(jnp.where(is_real, xs, 0.0), axis=1, keepdims=True)
        q_re = jnp.sum(jnp.where(is_real, xq, 0.0), axis=1, keepdims=True)
        sr[...] += s_re
        si[...] += s_all - s_re
        qr[...] += q_re
        qi[...] += q_all - q_re

    @pl.when(ph == 1)
    def _normalize():
        # TODO(synk): var = E[x^2] - mean^2 in plain f32 can cancel when
        # |mean| >> std; switch to a shifted/two-pass variance if needed.
        mean_r = sr[...] * inv_cnt                           # (Cb, 1)
        mean_i = si[...] * inv_cnt
        var_r = qr[...] * inv_cnt - mean_r * mean_r
        var_i = qi[...] * inv_cnt - mean_i * mean_i
        scale_r = params_ref[0] * jax.lax.rsqrt(var_r + eps)
        scale_i = params_ref[1] * jax.lax.rsqrt(var_i + eps)
        shift_r = params_ref[2] - mean_r * scale_r
        shift_i = params_ref[3] - mean_i * scale_i
        # Lane-parity select built once at 2D; broadcast over B only in the
        # final fused multiply-add (removes factor-of-B iota/compare/select).
        lane = jax.lax.broadcasted_iota(jnp.int32, (c_blk, l_tile), 1)
        is_real = (lane & 1) == 0
        scale = jnp.where(is_real, scale_r, scale_i)         # (Cb, Lt)
        shift = jnp.where(is_real, shift_r, shift_i)         # (Cb, Lt)
        xv = x_ref[...].astype(jnp.float32)                  # (B, Cb, Lt)
        o_ref[...] = (xv * scale[None] + shift[None]).astype(o_ref.dtype)


def cbatchnorm2d(x, gamma_real, beta_real, gamma_im, beta_im, *, eps=EPS):
    """x: (B, C, F, T, 2) -> (B, C, F, T, 2)"""
    B, C, Fr, T, two = x.shape
    assert two == 2
    L = Fr * T * 2                       # lanes: real/imag interleaved (even/odd)
    x3 = x.reshape(B, C, L)              # contiguous reshape, no HBM transpose

    # --- VMEM-aware sizing (perf review) ----------------------------------
    vmem_cap = _vmem_capacity_bytes()
    vmem_limit = (vmem_cap * 3) // 4     # ~96 MiB on 128-MiB parts, ~48 MiB on v7x
    # Per-buffer budget in f32-equivalent bytes: headroom for 2x double-buffered
    # x, 2x double-buffered out and the in-kernel f32 temporaries.
    budget = max(2 * 1024 * 1024, vmem_limit // 10)

    c_blk = _SUBLANE
    C_pad = _round_up(C, c_blk)
    per_lane_f32_bytes = B * c_blk * 4
    L_pad, l_tile, n_lt = _plan_lanes(L, per_lane_f32_bytes, budget)

    # Zero-pad C (sublane-dense, uniform, megacore-friendly channel blocks) and
    # L (lane-dense unmasked stores, bounded tile size).  Zero pad lanes/channels
    # do not perturb the statistics: inv_cnt uses the true B*F*T count.
    # TODO(synk): rely on Pallas partial edge blocks instead of this jnp.pad HBM
    # copy if the extra pass on oddly-shaped C/L ever matters.
    if C_pad != C or L_pad != L:
        x3 = jnp.pad(x3, ((0, 0), (0, C_pad - C), (0, L_pad - L)))

    # (4, C_pad, 1): [gamma_r, gamma_i, beta_r, beta_i] lane-broadcastable columns.
    params = jnp.stack(
        [gamma_real, gamma_im, beta_real, beta_im]).astype(jnp.float32)
    if C_pad != C:
        params = jnp.pad(params, ((0, 0), (0, C_pad - C)))
    params = params[:, :, None]

    n_cb = C_pad // c_blk
    inv_cnt = 1.0 / float(B * Fr * T)    # per-(channel, part) element count

    kernel = functools.partial(_cbn_kernel, inv_cnt=inv_cnt, eps=eps,
                               c_blk=c_blk, l_tile=l_tile)

    out3 = pl.pallas_call(
        kernel,
        out_shape=jax.ShapeDtypeStruct((B, C_pad, L_pad), x.dtype),
        grid_spec=pltpu.PrefetchScalarGridSpec(
            num_scalar_prefetch=0,
            grid=(n_cb, 2, n_lt),        # (channel blocks, phase, lane tiles)
            in_specs=[
                pl.BlockSpec((4, c_blk, 1), lambda cb, ph, lt: (0, cb, 0)),        # params
                pl.BlockSpec((B, c_blk, l_tile), lambda cb, ph, lt: (0, cb, lt)),  # x
            ],
            # Phase 0 pins the output block to lane-tile 0 (never written -> no
            # garbage writeback, stays resident); phase 1 writes each tile once.
            # With n_lt == 1 the x/out block indices never change within a
            # channel block, so x is fetched from HBM exactly once.
            out_specs=pl.BlockSpec((B, c_blk, l_tile),
                                   lambda cb, ph, lt: (0, cb, lt * ph)),
            scratch_shapes=[pltpu.VMEM((c_blk, 1), jnp.float32)] * 4,
        ),
        compiler_params=pltpu.CompilerParams(
            dimension_semantics=("parallel", "arbitrary", "arbitrary"),
            vmem_limit_bytes=int(vmem_limit),
        ),
    )(params, x3)

    if C_pad != C or L_pad != L:
        out3 = out3[:, :C, :L]
    return out3.reshape(B, C, Fr, T, 2)


def _reference(x, gamma_real, beta_real, gamma_im, beta_im):
    """Pure-JAX reference mirroring PyTorch training-mode BatchNorm2d."""
    def bn(part, g, b):
        mean = jnp.mean(part, axis=(0, 2, 3), keepdims=True)
        var = jnp.mean((part - mean) ** 2, axis=(0, 2, 3), keepdims=True)
        g = g.reshape(1, -1, 1, 1)
        b = b.reshape(1, -1, 1, 1)
        return (part - mean) / jnp.sqrt(var + EPS) * g + b

    xr = bn(x[..., 0], gamma_real, beta_real)
    xi = bn(x[..., 1], gamma_im, beta_im)
    return jnp.stack([xr, xi], axis=-1)


if __name__ == "__main__":
    B, C, Fr, T = 2, 4, 16, 16
    key = jax.random.PRNGKey(0)
    kx, kg1, kb1, kg2, kb2 = jax.random.split(key, 5)

    x = jax.random.normal(kx, (B, C, Fr, T, 2), dtype=jnp.float32)
    # PyTorch default init is weight=1, bias=0; use deterministic non-trivial
    # affine params so the scale/shift path is actually exercised.
    gamma_real = 1.0 + 0.1 * jax.random.normal(kg1, (C,), dtype=jnp.float32)
    beta_real = 0.1 * jax.random.normal(kb1, (C,), dtype=jnp.float32)
    gamma_im = 1.0 + 0.1 * jax.random.normal(kg2, (C,), dtype=jnp.float32)
    beta_im = 0.1 * jax.random.normal(kb2, (C,), dtype=jnp.float32)

    fn = jax.jit(cbatchnorm2d)
    out = fn(x, gamma_real, beta_real, gamma_im, beta_im)
    out = jax.block_until_ready(out)

    ref = _reference(x, gamma_real, beta_real, gamma_im, beta_im)
    assert out.shape == (B, C, Fr, T, 2)
    assert jnp.max(jnp.abs(out - ref)) < 1e-4

    print("KERNEL_OK")
</pallas_src>

<mosaic_0001>
module attributes {stable_mosaic.version = 11 : i64} {
  func.func @_cbn_kernel(%arg0: i32, %arg1: i32, %arg2: i32, %arg3: memref<4x8x1xf32, #tpu.memory_space<vmem>>, %arg4: memref<2x8x512xf32, #tpu.memory_space<vmem>>, %arg5: memref<2x8x512xf32, #tpu.memory_space<vmem>>, %arg6: memref<8x1xf32, #tpu.memory_space<vmem>>, %arg7: memref<8x1xf32, #tpu.memory_space<vmem>>, %arg8: memref<8x1xf32, #tpu.memory_space<vmem>>, %arg9: memref<8x1xf32, #tpu.memory_space<vmem>>) attributes {dimension_semantics = [#tpu.dimension_semantics<parallel>, #tpu.dimension_semantics<arbitrary>, #tpu.dimension_semantics<arbitrary>], iteration_bounds = array<i64: 1, 2, 1>, scalar_prefetch = 0 : i64, scratch_operands = 4 : i64, tpu.core_type = #tpu.core_type<tc>, window_params = [{transform_indices = @transform_0, window_bounds = array<i64: 4, 8, 1>}, {transform_indices = @transform_1, window_bounds = array<i64: 2, 8, 512>}, {transform_indices = @transform_2, window_bounds = array<i64: 2, 8, 512>}]} {
    %c0_i32 = arith.constant 0 : i32
    %0 = arith.cmpi eq, %arg1, %c0_i32 : i32
    %c0_i32_0 = arith.constant 0 : i32
    %1 = arith.cmpi eq, %arg2, %c0_i32_0 : i32
    %2 = arith.andi %0, %1 : i1
    %3 = arith.extui %2 : i1 to i32
    %c0_i32_1 = arith.constant 0 : i32
    %4 = arith.cmpi ne, %3, %c0_i32_1 : i32
    scf.if %4 {
      %cst = arith.constant 0.000000e+00 : f32
      %11 = vector.broadcast %cst : f32 to vector<8x1xf32>
      %c0 = arith.constant 0 : index
      %c0_5 = arith.constant 0 : index
      %12 = vector.load %arg6[%c0, %c0_5] : memref<8x1xf32, #tpu.memory_space<vmem>>, vector<8x1xf32>
      tpu.vector_store %arg6[%c0, %c0_5], %11 {strides = array<i32>} : memref<8x1xf32, #tpu.memory_space<vmem>>, vector<8x1xf32>,
      %cst_6 = arith.constant 0.000000e+00 : f32
      %13 = vector.broadcast %cst_6 : f32 to vector<8x1xf32>
      %c0_7 = arith.constant 0 : index
      %c0_8 = arith.constant 0 : index
      %14 = vector.load %arg7[%c0_7, %c0_8] : memref<8x1xf32, #tpu.memory_space<vmem>>, vector<8x1xf32>
      tpu.vector_store %arg7[%c0_7, %c0_8], %13 {strides = array<i32>} : memref<8x1xf32, #tpu.memory_space<vmem>>, vector<8x1xf32>,
      %cst_9 = arith.constant 0.000000e+00 : f32
      %15 = vector.broadcast %cst_9 : f32 to vector<8x1xf32>
      %c0_10 = arith.constant 0 : index
      %c0_11 = arith.constant 0 : index
      %16 = vector.load %arg8[%c0_10, %c0_11] : memref<8x1xf32, #tpu.memory_space<vmem>>, vector<8x1xf32>
      tpu.vector_store %arg8[%c0_10, %c0_11], %15 {strides = array<i32>} : memref<8x1xf32, #tpu.memory_space<vmem>>, vector<8x1xf32>,
      %cst_12 = arith.constant 0.000000e+00 : f32
      %17 = vector.broadcast %cst_12 : f32 to vector<8x1xf32>
      %c0_13 = arith.constant 0 : index
      %c0_14 = arith.constant 0 : index
      %18 = vector.load %arg9[%c0_13, %c0_14] : memref<8x1xf32, #tpu.memory_space<vmem>>, vector<8x1xf32>
      tpu.vector_store %arg9[%c0_13, %c0_14], %17 {strides = array<i32>} : memref<8x1xf32, #tpu.memory_space<vmem>>, vector<8x1xf32>,
    } else {
    }
    %c0_i32_2 = arith.constant 0 : i32
    %5 = arith.cmpi eq, %arg1, %c0_i32_2 : i32
    %6 = arith.extui %5 : i1 to i32
    %c0_i32_3 = arith.constant 0 : i32
    %7 = arith.cmpi ne, %6, %c0_i32_3 : i32
    scf.if %7 {
      %c0 = arith.constant 0 : index
      %c0_5 = arith.constant 0 : index
      %c0_6 = arith.constant 0 : index
      %11 = vector.load %arg4[%c0, %c0_5, %c0_6] : memref<2x8x512xf32, #tpu.memory_space<vmem>>, vector<2x8x512xf32>
      %cst = arith.constant dense<0.000000e+00> : vector<8x512xf32>
      %12 = vector.multi_reduction <add>, %11, %cst [0] : vector<2x8x512xf32> to vector<8x512xf32>
      %13 = arith.mulf %11, %11 : vector<2x8x512xf32>
      %cst_7 = arith.constant dense<0.000000e+00> : vector<8x512xf32>
      %14 = vector.multi_reduction <add>, %13, %cst_7 [0] : vector<2x8x512xf32> to vector<8x512xf32>
      %15 = tpu.iota {dimensions = array<i32: 1>} : vector<8x512xi32>
      %c1_i32_8 = arith.constant 1 : i32
      %16 = vector.broadcast %c1_i32_8 : i32 to vector<8x512xi32>
      %17 = arith.andi %15, %16 : vector<8x512xi32>
      %c0_i32_9 = arith.constant 0 : i32
      %18 = vector.broadcast %c0_i32_9 : i32 to vector<8x512xi32>
      %19 = arith.cmpi eq, %17, %18 : vector<8x512xi32>
      %cst_10 = arith.constant dense<0.000000e+00> : vector<8xf32>
      %20 = vector.multi_reduction <add>, %12, %cst_10 [1] : vector<8x512xf32> to vector<8xf32>
      %21 = vector.shape_cast %20 : vector<8xf32> to vector<8x1xf32>
      %cst_11 = arith.constant dense<0.000000e+00> : vector<8xf32>
      %22 = vector.multi_reduction <add>, %14, %cst_11 [1] : vector<8x512xf32> to vector<8xf32>
      %23 = vector.shape_cast %22 : vector<8xf32> to vector<8x1xf32>
      %cst_12 = arith.constant 0.000000e+00 : f32
      %24 = vector.broadcast %cst_12 : f32 to vector<8x512xf32>
      %25 = arith.select %19, %12, %24 : vector<8x512xi1>, vector<8x512xf32>
      %cst_13 = arith.constant dense<0.000000e+00> : vector<8xf32>
      %26 = vector.multi_reduction <add>, %25, %cst_13 [1] : vector<8x512xf32> to vector<8xf32>
      %27 = vector.shape_cast %26 : vector<8xf32> to vector<8x1xf32>
      %cst_14 = arith.constant 0.000000e+00 : f32
      %28 = vector.broadcast %cst_14 : f32 to vector<8x512xf32>
      %29 = arith.select %19, %14, %28 : vector<8x512xi1>, vector<8x512xf32>
      %cst_15 = arith.constant dense<0.000000e+00> : vector<8xf32>
      %30 = vector.multi_reduction <add>, %29, %cst_15 [1] : vector<8x512xf32> to vector<8xf32>
      %31 = vector.shape_cast %30 : vector<8xf32> to vector<8x1xf32>
      %c0_16 = arith.constant 0 : index
      %c0_17 = arith.constant 0 : index
      %32 = vector.load %arg6[%c0_16, %c0_17] : memref<8x1xf32, #tpu.memory_space<vmem>>, vector<8x1xf32>
      %33 = arith.addf %32, %27 : vector<8x1xf32>
      %c0_18 = arith.constant 0 : index
      %c0_19 = arith.constant 0 : index
      %34 = vector.load %arg6[%c0_18, %c0_19] : memref<8x1xf32, #tpu.memory_space<vmem>>, vector<8x1xf32>
      tpu.vector_store %arg6[%c0_18, %c0_19], %33 {strides = array<i32>} : memref<8x1xf32, #tpu.memory_space<vmem>>, vector<8x1xf32>,
      %c0_20 = arith.constant 0 : index
      %c0_21 = arith.constant 0 : index
      %35 = vector.load %arg7[%c0_20, %c0_21] : memref<8x1xf32, #tpu.memory_space<vmem>>, vector<8x1xf32>
      %36 = arith.subf %21, %27 : vector<8x1xf32>
      %37 = arith.addf %35, %36 : vector<8x1xf32>
      %c0_22 = arith.constant 0 : index
      %c0_23 = arith.constant 0 : index
      %38 = vector.load %arg7[%c0_22, %c0_23] : memref<8x1xf32, #tpu.memory_space<vmem>>, vector<8x1xf32>
      tpu.vector_store %arg7[%c0_22, %c0_23], %37 {strides = array<i32>} : memref<8x1xf32, #tpu.memory_space<vmem>>, vector<8x1xf32>,
      %c0_24 = arith.constant 0 : index
      %c0_25 = arith.constant 0 : index
      %39 = vector.load %arg8[%c0_24, %c0_25] : memref<8x1xf32, #tpu.memory_space<vmem>>, vector<8x1xf32>
      %40 = arith.addf %39, %31 : vector<8x1xf32>
      %c0_26 = arith.constant 0 : index
      %c0_27 = arith.constant 0 : index
      %41 = vector.load %arg8[%c0_26, %c0_27] : memref<8x1xf32, #tpu.memory_space<vmem>>, vector<8x1xf32>
      tpu.vector_store %arg8[%c0_26, %c0_27], %40 {strides = array<i32>} : memref<8x1xf32, #tpu.memory_space<vmem>>, vector<8x1xf32>,
      %c0_28 = arith.constant 0 : index
      %c0_29 = arith.constant 0 : index
      %42 = vector.load %arg9[%c0_28, %c0_29] : memref<8x1xf32, #tpu.memory_space<vmem>>, vector<8x1xf32>
      %43 = arith.subf %23, %31 : vector<8x1xf32>
      %44 = arith.addf %42, %43 : vector<8x1xf32>
      %c0_30 = arith.constant 0 : index
      %c0_31 = arith.constant 0 : index
      %45 = vector.load %arg9[%c0_30, %c0_31] : memref<8x1xf32, #tpu.memory_space<vmem>>, vector<8x1xf32>
      tpu.vector_store %arg9[%c0_30, %c0_31], %44 {strides = array<i32>} : memref<8x1xf32, #tpu.memory_space<vmem>>, vector<8x1xf32>,
    } else {
    }
    %c1_i32 = arith.constant 1 : i32
    %8 = arith.cmpi eq, %arg1, %c1_i32 : i32
    %9 = arith.extui %8 : i1 to i32
    %c0_i32_4 = arith.constant 0 : i32
    %10 = arith.cmpi ne, %9, %c0_i32_4 : i32
    scf.if %10 {
      %c0 = arith.constant 0 : index
      %c0_5 = arith.constant 0 : index
      %11 = vector.load %arg6[%c0, %c0_5] : memref<8x1xf32, #tpu.memory_space<vmem>>, vector<8x1xf32>
      %cst = arith.constant 0.001953125 : f32
      %12 = vector.broadcast %cst : f32 to vector<8x1xf32>
      %13 = arith.mulf %11, %12 : vector<8x1xf32>
      %c0_6 = arith.constant 0 : index
      %c0_7 = arith.constant 0 : index
      %14 = vector.load %arg7[%c0_6, %c0_7] : memref<8x1xf32, #tpu.memory_space<vmem>>, vector<8x1xf32>
      %cst_8 = arith.constant 0.001953125 : f32
      %15 = vector.broadcast %cst_8 : f32 to vector<8x1xf32>
      %16 = arith.mulf %14, %15 : vector<8x1xf32>
      %c0_9 = arith.constant 0 : index
      %c0_10 = arith.constant 0 : index
      %17 = vector.load %arg8[%c0_9, %c0_10] : memref<8x1xf32, #tpu.memory_space<vmem>>, vector<8x1xf32>
      %cst_11 = arith.constant 0.001953125 : f32
      %18 = vector.broadcast %cst_11 : f32 to vector<8x1xf32>
      %19 = arith.mulf %17, %18 : vector<8x1xf32>
      %20 = arith.mulf %13, %13 : vector<8x1xf32>
      %21 = arith.subf %19, %20 : vector<8x1xf32>
      %c0_12 = arith.constant 0 : index
      %c0_13 = arith.constant 0 : index
      %22 = vector.load %arg9[%c0_12, %c0_13] : memref<8x1xf32, #tpu.memory_space<vmem>>, vector<8x1xf32>
      %cst_14 = arith.constant 0.001953125 : f32
      %23 = vector.broadcast %cst_14 : f32 to vector<8x1xf32>
      %24 = arith.mulf %22, %23 : vector<8x1xf32>
      %25 = arith.mulf %16, %16 : vector<8x1xf32>
      %26 = arith.subf %24, %25 : vector<8x1xf32>
      %c0_15 = arith.constant 0 : index
      %c0_16 = arith.constant 0 : index
      %c0_17 = arith.constant 0 : index
      %27 = vector.load %arg3[%c0_15, %c0_16, %c0_17] : memref<4x8x1xf32, #tpu.memory_space<vmem>>, vector<1x8x1xf32>
      %28 = vector.shape_cast %27 : vector<1x8x1xf32> to vector<8x1xf32>
      %cst_18 = arith.constant 9.99999974E-6 : f32
      %29 = vector.broadcast %cst_18 : f32 to vector<8x1xf32>
      %30 = arith.addf %21, %29 : vector<8x1xf32>
      %31 = math.rsqrt %30 : vector<8x1xf32>
      %32 = arith.mulf %28, %31 : vector<8x1xf32>
      %c1 = arith.constant 1 : index
      %c0_19 = arith.constant 0 : index
      %c0_20 = arith.constant 0 : index
      %33 = vector.load %arg3[%c1, %c0_19, %c0_20] : memref<4x8x1xf32, #tpu.memory_space<vmem>>, vector<1x8x1xf32>
      %34 = vector.shape_cast %33 : vector<1x8x1xf32> to vector<8x1xf32>
      %cst_21 = arith.constant 9.99999974E-6 : f32
      %35 = vector.broadcast %cst_21 : f32 to vector<8x1xf32>
      %36 = arith.addf %26, %35 : vector<8x1xf32>
      %37 = math.rsqrt %36 : vector<8x1xf32>
      %38 = arith.mulf %34, %37 : vector<8x1xf32>
      %c2 = arith.constant 2 : index
      %c0_22 = arith.constant 0 : index
      %c0_23 = arith.constant 0 : index
      %39 = vector.load %arg3[%c2, %c0_22, %c0_23] : memref<4x8x1xf32, #tpu.memory_space<vmem>>, vector<1x8x1xf32>
      %40 = vector.shape_cast %39 : vector<1x8x1xf32> to vector<8x1xf32>
      %41 = arith.mulf %13, %32 : vector<8x1xf32>
      %42 = arith.subf %40, %41 : vector<8x1xf32>
      %c3 = arith.constant 3 : index
      %c0_24 = arith.constant 0 : index
      %c0_25 = arith.constant 0 : index
      %43 = vector.load %arg3[%c3, %c0_24, %c0_25] : memref<4x8x1xf32, #tpu.memory_space<vmem>>, vector<1x8x1xf32>
      %44 = vector.shape_cast %43 : vector<1x8x1xf32> to vector<8x1xf32>
      %45 = arith.mulf %16, %38 : vector<8x1xf32>
      %46 = arith.subf %44, %45 : vector<8x1xf32>
      %47 = tpu.iota {dimensions = array<i32: 1>} : vector<8x512xi32>
      %c1_i32_26 = arith.constant 1 : i32
      %48 = vector.broadcast %c1_i32_26 : i32 to vector<8x512xi32>
      %49 = arith.andi %47, %48 : vector<8x512xi32>
      %c0_i32_27 = arith.constant 0 : i32
      %50 = vector.broadcast %c0_i32_27 : i32 to vector<8x512xi32>
      %51 = arith.cmpi eq, %49, %50 : vector<8x512xi32>
      %52 = vector.shape_cast %32 : vector<8x1xf32> to vector<8x1xf32>
      %53 = vector.broadcast %52 : vector<8x1xf32> to vector<8x512xf32>
      %54 = vector.shape_cast %38 : vector<8x1xf32> to vector<8x1xf32>
      %55 = vector.broadcast %54 : vector<8x1xf32> to vector<8x512xf32>
      %56 = arith.select %51, %53, %55 : vector<8x512xi1>, vector<8x512xf32>
      %57 = vector.shape_cast %42 : vector<8x1xf32> to vector<8x1xf32>
      %58 = vector.broadcast %57 : vector<8x1xf32> to vector<8x512xf32>
      %59 = vector.shape_cast %46 : vector<8x1xf32> to vector<8x1xf32>
      %60 = vector.broadcast %59 : vector<8x1xf32> to vector<8x512xf32>
      %61 = arith.select %51, %58, %60 : vector<8x512xi1>, vector<8x512xf32>
      %c0_28 = arith.constant 0 : index
      %c0_29 = arith.constant 0 : index
      %c0_30 = arith.constant 0 : index
      %62 = vector.load %arg4[%c0_28, %c0_29, %c0_30] : memref<2x8x512xf32, #tpu.memory_space<vmem>>, vector<2x8x512xf32>
      %63 = vector.shape_cast %56 : vector<8x512xf32> to vector<1x8x512xf32>
      %64 = vector.broadcast %63 : vector<1x8x512xf32> to vector<2x8x512xf32>
      %65 = arith.mulf %62, %64 : vector<2x8x512xf32>
      %66 = vector.shape_cast %61 : vector<8x512xf32> to vector<1x8x512xf32>
      %67 = vector.broadcast %66 : vector<1x8x512xf32> to vector<2x8x512xf32>
      %68 = arith.addf %65, %67 : vector<2x8x512xf32>
      %c0_31 = arith.constant 0 : index
      %c0_32 = arith.constant 0 : index
      %c0_33 = arith.constant 0 : index
      %69 = vector.load %arg5[%c0_31, %c0_32, %c0_33] : memref<2x8x512xf32, #tpu.memory_space<vmem>>, vector<2x8x512xf32>
      tpu.vector_store %arg5[%c0_31, %c0_32, %c0_33], %68 {strides = array<i32>} : memref<2x8x512xf32, #tpu.memory_space<vmem>>, vector<2x8x512xf32>,
    } else {
    }
    return
  }
  func.func @transform_0(%arg0: i32, %arg1: i32, %arg2: i32) -> (i32, i32, i32) {
    %c0_i32 = arith.constant 0 : i32
    %c0_i32_0 = arith.constant 0 : i32
    %c0_i32_1 = arith.constant 0 : i32
    return %c0_i32, %arg0, %c0_i32_0 : i32, i32, i32
  }
  func.func @transform_1(%arg0: i32, %arg1: i32, %arg2: i32) -> (i32, i32, i32) {
    %c0_i32 = arith.constant 0 : i32
    %c0_i32_0 = arith.constant 0 : i32
    return %c0_i32, %arg0, %arg2 : i32, i32, i32
  }
  func.func @transform_2(%arg0: i32, %arg1: i32, %arg2: i32) -> (i32, i32, i32) {
    %0 = arith.muli %arg2, %arg1 : i32
    %c0_i32 = arith.constant 0 : i32
    %c0_i32_0 = arith.constant 0 : i32
    return %c0_i32, %arg0, %0 : i32, i32, i32
  }
}

</mosaic_0001>

<llo_original>
// kernel: cbatchnorm2d.1
$region0: #{cbatchnorm2d.1}
  #allocation0 [shape = 'u32[]', space=smem, size = 0x4, offset = 0x4, fixed_abs, tag = 'smem constant byte address 0x4 - core index']
  #allocation1 [shape = 'u32[72,128]{1,0:T(1,128)}', space=vmem, size = 0x9000, scoped, tag = 'internal scratch']
  #allocation2 [shape = 'f32[8,1]{1,0:T(8,128)}', space=vmem, size = 0x1000, scoped, tag = 'scratch operand']
  #allocation3 [shape = 'f32[8,1]{1,0:T(8,128)}', space=vmem, size = 0x1000, scoped, tag = 'scratch operand']
  #allocation4 [shape = 'f32[8,1]{1,0:T(8,128)}', space=vmem, size = 0x1000, scoped, tag = 'scratch operand']
  #allocation5 [shape = 'f32[8,1]{1,0:T(8,128)}', space=vmem, size = 0x1000, scoped, tag = 'scratch operand']
  %s0 = inlined_call_operand.vmem [shape: f32[4,8,1], index: 0, kind: input, shape index: {}]
  %s1 = inlined_call_operand.vmem [shape: f32[2,8,512], index: 1, kind: input, shape index: {}]
  %s2 = inlined_call_operand.vmem [shape: f32[2,8,512], index: 2, kind: output, shape index: {}]
  %s3 = sld [smem:[#allocation0]]
  $region53: #{cbatchnorm2d.1} parent=0
    _
  %s5 = ssub.s32 1, %s3
  %s6 = scalar_select 0, %s5, %s3
  loop: start=0, step=1, limit=4
  $region2: #{cbatchnorm2d.1} parent=0 // loop_pre_header
    _
  $region3: #{cbatchnorm2d.1} parent=0 // loop_header
    %s8 = sphi 0, %s12
    %p9 = scmp.ge.s32.totalorder %s8, 4
    %s15 = sphi 0, %s34
    %s16 = sphi 0, %s30
    %s17 = sphi 0, %s26
    %s18 = sphi 0, %s15
    %s19 = sphi 0, %s16
    %s20 = sphi 0, %s17
    %s21 = sphi 0, %s18
    %s22 = sphi 0, %s19
    %s23 = sphi 0, %s20
    %s37 = sphi 0, %s39
    %s40 = sphi 0, %s37
    %s41 = sphi 0, %s40
    %s57 = sphi 0, %s41
    %s65 = sphi 0, %s67
    %s68 = sphi 0, %s65
    %s69 = sphi 0, %s68
    %s85 = sphi 0, %s69
    %s95 = sphi 0, %s97
    %s98 = sphi 0, %s95
    %s99 = sphi 0, %s98
    %s115 = sphi 0, %s99
  $region4: #{cbatchnorm2d.1} parent=0 // loop_header_branch
    %11 = sbr.rel (%p9) target = $region8
  $region5: #{cbatchnorm2d.1} parent=0 // loop_body
    %s13 = ssub.s32 %s8, 1
    %s14 = ssub.s32 %s8, 2
    %s24 = sadd.s32 1, %s17
    %p25 = scmp.ge.s32.totalorder %s24, 1
    %s26 = scalar_select %p25, 0, %s24
    %s27 = sadd.s32 1, %s16
    %s28 = scalar_select %p25, %s27, %s16
    %p29 = scmp.ge.s32.totalorder %s28, 2
    %s30 = scalar_select %p29, 0, %s28
    %s31 = sadd.s32 1, %s15
    %s32 = scalar_select %p29, %s31, %s15
    %p33 = scmp.ge.s32.totalorder %s32, 1
    %s34 = scalar_select %p33, 0, %s32
    %s35 = ssub.s32 %s15, %s34
    %p36 = scmp.eq.s32.totalorder %s35, 0
    %s38 = sadd.s32 %s37, 1
    %s39 = scalar_select %p36, %s37, %s38
    %p42 = pneg %p36
    %p43 = scmp.eq.s32.totalorder %s8, 1
    %p44 = por %p42, %p43
    %p45 = scmp.ne.s32.totalorder %s37, %s40
    %p46 = scmp.eq.s32.totalorder %s8, 0
    %p47 = por %p45, %p46
    %p48 = scmp.ne.s32.totalorder %s37, %s40
    %p49 = scmp.eq.s32.totalorder %s13, 1
    %p50 = por %p48, %p49
    %p51 = scmp.ne.s32.totalorder %s40, %s41
    %p52 = scmp.eq.s32.totalorder %s13, 0
    %p53 = por %p51, %p52
    %p54 = scmp.ne.s32.totalorder %s40, %s41
    %p55 = scmp.eq.s32.totalorder %s14, 1
    %p56 = por %p54, %p55
    %p58 = scmp.ne.s32.totalorder %s41, %s57
    %p59 = scmp.eq.s32.totalorder %s14, 0
    %p60 = por %p58, %p59
    %s61 = ssub.s32 %s15, %s34
    %s62 = ssub.s32 %s17, %s26
    %s63 = sor.u32 %s61, %s62
    %p64 = scmp.eq.s32.totalorder %s63, 0
    %s66 = sadd.s32 %s65, 1
    %s67 = scalar_select %p64, %s65, %s66
    %p70 = pneg %p64
    %p71 = scmp.eq.s32.totalorder %s8, 1
    %p72 = por %p70, %p71
    %p73 = scmp.ne.s32.totalorder %s65, %s68
    %p74 = scmp.eq.s32.totalorder %s8, 0
    %p75 = por %p73, %p74
    %p76 = scmp.ne.s32.totalorder %s65, %s68
    %p77 = scmp.eq.s32.totalorder %s13, 1
    %p78 = por %p76, %p77
    %p79 = scmp.ne.s32.totalorder %s68, %s69
    %p80 = scmp.eq.s32.totalorder %s13, 0
    %p81 = por %p79, %p80
    %p82 = scmp.ne.s32.totalorder %s68, %s69
    %p83 = scmp.eq.s32.totalorder %s14, 1
    %p84 = por %p82, %p83
    %p86 = scmp.ne.s32.totalorder %s69, %s85
    %p87 = scmp.eq.s32.totalorder %s14, 0
    %p88 = por %p86, %p87
    %s89 = smul.u32 %s17, %s16
    %s90 = smul.u32 %s26, %s30
    %s91 = ssub.s32 %s15, %s34
    %s92 = ssub.s32 %s89, %s90
    %s93 = sor.u32 %s91, %s92
    %p94 = scmp.eq.s32.totalorder %s93, 0
    %s96 = sadd.s32 %s95, 1
    %s97 = scalar_select %p94, %s95, %s96
    %p100 = pneg %p94
    %p101 = scmp.eq.s32.totalorder %s8, 1
    %p102 = por %p100, %p101
    %p103 = scmp.ne.s32.totalorder %s95, %s98
    %p104 = scmp.eq.s32.totalorder %s8, 0
    %p105 = por %p103, %p104
    %p106 = scmp.ne.s32.totalorder %s95, %s98
    %p107 = scmp.eq.s32.totalorder %s13, 1
    %p108 = por %p106, %p107
    %p109 = scmp.ne.s32.totalorder %s98, %s99
    %p110 = scmp.eq.s32.totalorder %s13, 0
    %p111 = por %p109, %p110
    %p112 = scmp.ne.s32.totalorder %s98, %s99
    %p113 = scmp.eq.s32.totalorder %s14, 1
    %p114 = por %p112, %p113
    %p116 = scmp.ne.s32.totalorder %s99, %s115
    %p117 = scmp.eq.s32.totalorder %s14, 0
    %p118 = por %p116, %p117
    %p119 = scmp.le.s32.totalorder 1, %s8
    %p120 = scmp.lt.s32.totalorder %s8, 3
    %p121 = pnand %p119, %p120
    %p122 = pneg %p121
    // Predicated region
    $region9: #{cbatchnorm2d.1} parent=5 // pred_check
      _
    $region10: #{cbatchnorm2d.1} parent=5 // pred_check_branch
      %124 = sbr.rel (%p121) target = $region12
    $region11: #{cbatchnorm2d.1} parent=5 // pred_region
      %s125 = ssub.s32 %s8, 1
      // Predicated region
      $region13: #{cbatchnorm2d.1} parent=11 // pred_check
        %p126 = pneg %p53
      $region14: #{cbatchnorm2d.1} parent=11 // pred_check_branch
        %128 = sbr.rel (%p126) target = $region16
      $region15: #{cbatchnorm2d.1} parent=11 // pred_region
        %p129 = scmp.lt.s32.totalorder %s18, 0
        %s130 = scalar_select %p129, %s18, 0
        %s131 = smul.addr %s130, 8
        %s132 = scalar_lea.vmem %s0, %s131
      $region16: #{cbatchnorm2d.1} parent=11 // pred_fallthru
        _
      // Predicated region
      $region17: #{cbatchnorm2d.1} parent=11 // pred_check
        %p133 = pneg %p81
      $region18: #{cbatchnorm2d.1} parent=11 // pred_check_branch
        %135 = sbr.rel (%p133) target = $region20
      $region19: #{cbatchnorm2d.1} parent=11 // pred_region
        %s136 = smul.u32 4, %s20
        %p137 = scmp.lt.s32.totalorder %s18, 0
        %s138 = scalar_select %p137, %s18, 0
        %p139 = scmp.lt.s32.totalorder %s136, 3
        %s140 = scalar_select %p139, %s136, 3
        %s141 = smul.addr %s138, 4
        %s142 = sadd.s32 %s140, %s141
        %s143 = smul.addr %s142, 8
        %s144 = scalar_lea.vmem %s1, %s143
        %s145 = smul.u32 4, %s20
      $region20: #{cbatchnorm2d.1} parent=11 // pred_fallthru
        _
    $region12: #{cbatchnorm2d.1} parent=5 // pred_fallthru
      _
    %p146 = scmp.lt.s32.totalorder %s8, 2
    // Predicated region
    $region21: #{cbatchnorm2d.1} parent=5 // pred_check
      %p147 = pneg %p146
    $region22: #{cbatchnorm2d.1} parent=5 // pred_check_branch
      %149 = sbr.rel (%p147) target = $region24
    $region23: #{cbatchnorm2d.1} parent=5 // pred_region
      _
    $region24: #{cbatchnorm2d.1} parent=5 // pred_fallthru
      _
    %p150 = scmp.le.s32.totalorder 1, %s8
    %p151 = scmp.lt.s32.totalorder %s8, 3
    %p152 = pnand %p150, %p151
    %p153 = pneg %p152
    // Predicated region
    $region25: #{cbatchnorm2d.1} parent=5 // pred_check
      _
    $region26: #{cbatchnorm2d.1} parent=5 // pred_check_branch
      %155 = sbr.rel (%p152) target = $region28
    $region27: #{cbatchnorm2d.1} parent=5 // pred_region
      %s156 = ssub.s32 %s8, 1
      %p157 = scmp.lt.s32.totalorder %s18, 0
      %s158 = scalar_select %p157, %s18, 0
      %s159 = smul.addr %s158, 8
      %s160 = scalar_lea.vmem %s0, %s159
      %p161 = pneg %p53
      %p162 = pneg %p50
      %s163 = smul.u32 4, %s20
      %p164 = scmp.lt.s32.totalorder %s18, 0
      %s165 = scalar_select %p164, %s18, 0
      %p166 = scmp.lt.s32.totalorder %s163, 3
      %s167 = scalar_select %p166, %s163, 3
      %s168 = smul.addr %s165, 4
      %s169 = sadd.s32 %s167, %s168
      %s170 = smul.addr %s169, 8
      %s171 = scalar_lea.vmem %s1, %s170
      %p172 = pneg %p81
      %p173 = pneg %p78
      %p174 = pneg %p111
      %p175 = pneg %p108
      %s176 = smul.u32 %s20, %s19
      %s177 = smul.u32 4, %s176
      %p178 = scmp.lt.s32.totalorder %s18, 0
      %s179 = scalar_select %p178, %s18, 0
      %p180 = scmp.lt.s32.totalorder %s177, 3
      %s181 = scalar_select %p180, %s177, 3
      %s182 = smul.addr %s179, 4
      %s183 = sadd.s32 %s181, %s182
      %s184 = smul.addr %s183, 8
      %s185 = scalar_lea.vmem %s2, %s184
      %p186 = scmp.lt.s32.totalorder %s18, 0
      %s187 = scalar_select %p186, %s18, 0
      %s188 = smul.addr %s187, 8
      %s189 = scalar_lea.vmem %s0, %s188
      %s190 = smul.u32 4, %s20
      %p191 = scmp.lt.s32.totalorder %s18, 0
      %s192 = scalar_select %p191, %s18, 0
      %p193 = scmp.lt.s32.totalorder %s190, 3
      %s194 = scalar_select %p193, %s190, 3
      %s195 = smul.addr %s192, 4
      %s196 = sadd.s32 %s194, %s195
      %s197 = smul.addr %s196, 8
      %s198 = scalar_lea.vmem %s1, %s197
      %s199 = smul.u32 4, %s20
      %s200 = smul.u32 %s20, %s19
      %s201 = smul.u32 4, %s200
      %p202 = scmp.lt.s32.totalorder %s18, 0
      %s203 = scalar_select %p202, %s18, 0
      %p204 = scmp.lt.s32.totalorder %s201, 3
      %s205 = scalar_select %p204, %s201, 3
      %s206 = smul.addr %s203, 4
      %s207 = sadd.s32 %s205, %s206
      %s208 = smul.addr %s207, 8
      %s209 = scalar_lea.vmem %s2, %s208
      %s210 = smul.u32 %s20, %s19
      %s211 = smul.u32 4, %s210
      %p212 = scmp.eq.s32.totalorder %s19, 0
      %p213 = scmp.eq.s32.totalorder %s20, 0
      %p214 = pnand %p212, %p213
      %p215 = pneg %p214
      // Predicated region
      $region29: #{cbatchnorm2d.1} parent=27 // pred_check
        _
      $region30: #{cbatchnorm2d.1} parent=27 // pred_check_branch
        %217 = sbr.rel (%p214) target = $region32
      $region31: #{cbatchnorm2d.1} parent=27 // pred_region
        %vm218 = vcmask 7168
        %219 = vst.msk [vmem:[#allocation2] sm:$0xff] %vm218, 0.0
        %220 = vst.msk [vmem:[#allocation3] sm:$0xff] %vm218, 0.0
        %221 = vst.msk [vmem:[#allocation4] sm:$0xff] %vm218, 0.0
        %222 = vst.msk [vmem:[#allocation5] sm:$0xff] %vm218, 0.0
      $region32: #{cbatchnorm2d.1} parent=27 // pred_fallthru
        _
      // Predicated region
      $region33: #{cbatchnorm2d.1} parent=27 // pred_check
        %p223 = pneg %p212
      $region34: #{cbatchnorm2d.1} parent=27 // pred_check_branch
        %225 = sbr.rel (%p223) target = $region36
      $region35: #{cbatchnorm2d.1} parent=27 // pred_region
        %v226 = vld [vmem:[%s198] sm:$0xff]
        %v227 = vld [vmem:[%s198 + $0x8] sm:$0xff]
        %v228 = vld [vmem:[%s198 + $0x10] sm:$0xff]
        %v229 = vld [vmem:[%s198 + $0x18] sm:$0xff]
        %v230 = vld [vmem:[%s198 + $0x20] sm:$0xff]
        %v231 = vld [vmem:[%s198 + $0x28] sm:$0xff]
        %v232 = vld [vmem:[%s198 + $0x30] sm:$0xff]
        %v233 = vld [vmem:[%s198 + $0x38] sm:$0xff]
        %v234 = vadd.f32 %v226, %v230
        %v235 = vadd.f32 %v227, %v231
        %v236 = vadd.f32 %v228, %v232
        %v237 = vadd.f32 %v229, %v233
        %v238 = vmul.f32 %v226, %v226
        %v239 = vmul.f32 %v227, %v227
        %v240 = vmul.f32 %v228, %v228
        %v241 = vmul.f32 %v229, %v229
        %v242 = vmul.f32 %v230, %v230
        %v243 = vmul.f32 %v231, %v231
        %v244 = vmul.f32 %v232, %v232
        %v245 = vmul.f32 %v233, %v233
        %v246 = vadd.f32 %v238, %v242
        %v247 = vadd.f32 %v239, %v243
        %v248 = vadd.f32 %v240, %v244
        %v249 = vadd.f32 %v241, %v245
        %v250 = vlaneseq
        %v251 = vand.u32 %v250, 127
        %v252 = vadd.s32 %v251, 128
        %v253 = vadd.s32 %v251, 256
        %v254 = vadd.s32 %v251, 384
        %v255 = vand.u32 %v251, 1
        %v256 = vand.u32 %v252, 1
        %v257 = vand.u32 %v253, 1
        %v258 = vand.u32 %v254, 1
        %vm259 = vcmp.eq.s32.totalorder %v255, 0
        %vm260 = vcmp.eq.s32.totalorder %v256, 0
        %vm261 = vcmp.eq.s32.totalorder %v257, 0
        %vm262 = vcmp.eq.s32.totalorder %v258, 0
        %v263 = vadd.f32 %v234, %v235
        %v264 = vadd.f32 %v263, %v236
        %v265 = vadd.f32 %v264, %v237
        %266 = vadd.xlane.f32.xlu0 %v265
        %v267 = vpop.xlane.xlu0 %266
        %v268 = vadd.f32 %v246, %v247
        %v269 = vadd.f32 %v268, %v248
        %v270 = vadd.f32 %v269, %v249
        %271 = vadd.xlane.f32.xlu0 %v270
        %v272 = vpop.xlane.xlu0 %271
        %v273 = vsel %vm259, %v234, 0.0
        %v274 = vsel %vm260, %v235, 0.0
        %v275 = vsel %vm261, %v236, 0.0
        %v276 = vsel %vm262, %v237, 0.0
        %v277 = vadd.f32 %v273, %v274
        %v278 = vadd.f32 %v277, %v275
        %v279 = vadd.f32 %v278, %v276
        %280 = vadd.xlane.f32.xlu0 %v279
        %v281 = vpop.xlane.xlu0 %280
        %v282 = vsel %vm259, %v246, 0.0
        %v283 = vsel %vm260, %v247, 0.0
        %v284 = vsel %vm261, %v248, 0.0
        %v285 = vsel %vm262, %v249, 0.0
        %v286 = vadd.f32 %v282, %v283
        %v287 = vadd.f32 %v286, %v284
        %v288 = vadd.f32 %v287, %v285
        %289 = vadd.xlane.f32.xlu0 %v288
        %v290 = vpop.xlane.xlu0 %289
        %v291 = vld [vmem:[#allocation2] sm:$0xff]
        %v292 = vadd.f32 %v291, %v281
        %vm293 = vcmask 7168
        %294 = vst.msk [vmem:[#allocation2] sm:$0xff] %vm293, %v292
        %v295 = vld [vmem:[#allocation3] sm:$0xff]
        %v296 = vsub.f32 %v267, %v281
        %v297 = vadd.f32 %v295, %v296
        %298 = vst.msk [vmem:[#allocation3] sm:$0xff] %vm293, %v297
        %v299 = vld [vmem:[#allocation4] sm:$0xff]
        %v300 = vadd.f32 %v299, %v290
        %301 = vst.msk [vmem:[#allocation4] sm:$0xff] %vm293, %v300
        %v302 = vld [vmem:[#allocation5] sm:$0xff]
        %v303 = vsub.f32 %v272, %v290
        %v304 = vadd.f32 %v302, %v303
        %305 = vst.msk [vmem:[#allocation5] sm:$0xff] %vm293, %v304
      $region36: #{cbatchnorm2d.1} parent=27 // pred_fallthru
        _
      %p306 = scmp.eq.s32.totalorder %s19, 1
      // Predicated region
      $region37: #{cbatchnorm2d.1} parent=27 // pred_check
        %p307 = pneg %p306
      $region38: #{cbatchnorm2d.1} parent=27 // pred_check_branch
        %309 = sbr.rel (%p307) target = $region40
      $region39: #{cbatchnorm2d.1} parent=27 // pred_region
        %v310 = vld [vmem:[#allocation2] sm:$0xff]
        %v311 = vmul.f32 %v310, 0.001953125
        %v312 = vld [vmem:[#allocation3] sm:$0xff]
        %v313 = vmul.f32 %v312, 0.001953125
        %v314 = vld [vmem:[#allocation4] sm:$0xff]
        %v315 = vmul.f32 %v314, 0.001953125
        %v316 = vmul.f32 %v311, %v311
        %v317 = vsub.f32 %v315, %v316
        %v318 = vld [vmem:[#allocation5] sm:$0xff]
        %v319 = vmul.f32 %v318, 0.001953125
        %v320 = vmul.f32 %v313, %v313
        %v321 = vsub.f32 %v319, %v320
        %v322 = vld [vmem:[%s189] sm:$0xff]
        %v323 = vadd.f32 %v317, 1e-05
        %v324 = vrsqrt.pop %v323
        %v325 = vmul.f32 %v324, %v323
        %v326 = vmul.f32 %v325, %v324
        %v327 = vmul.f32 0.5, %v326
        %v328 = vsub.f32 1.5, %v327
        %v329 = vmul.f32 %v324, %v328
        %vm330 = vweird.f32 %v323
        %vm331 = vweird.f32 %v324
        %vm332 = vmor %vm330, %vm331
        %v333 = vsel %vm332, %v324, %v329
        %v334 = vmul.f32 %v322, %v333
        %s335 = scalar_lea.vmem %s189, 8
        %v336 = vld [vmem:[%s335] sm:$0xff]
        %v337 = vadd.f32 %v321, 1e-05
        %v338 = vrsqrt.pop %v337
        %v339 = vmul.f32 %v338, %v337
        %v340 = vmul.f32 %v339, %v338
        %v341 = vmul.f32 0.5, %v340
        %v342 = vsub.f32 1.5, %v341
        %v343 = vmul.f32 %v338, %v342
        %vm344 = vweird.f32 %v337
        %vm345 = vweird.f32 %v338
        %vm346 = vmor %vm344, %vm345
        %v347 = vsel %vm346, %v338, %v343
        %v348 = vmul.f32 %v336, %v347
        %s349 = scalar_lea.vmem %s189, 16
        %v350 = vld [vmem:[%s349] sm:$0xff]
        %v351 = vmul.f32 %v311, %v334
        %v352 = vsub.f32 %v350, %v351
        %s353 = scalar_lea.vmem %s189, 24
        %v354 = vld [vmem:[%s353] sm:$0xff]
        %v355 = vmul.f32 %v313, %v348
        %v356 = vsub.f32 %v354, %v355
        %v357 = vlaneseq
        %v358 = vand.u32 %v357, 127
        %v359 = vadd.s32 %v358, 128
        %v360 = vadd.s32 %v358, 256
        %v361 = vadd.s32 %v358, 384
        %v362 = vand.u32 %v358, 1
        %v363 = vand.u32 %v359, 1
        %v364 = vand.u32 %v360, 1
        %v365 = vand.u32 %v361, 1
        %vm366 = vcmp.eq.s32.totalorder %v362, 0
        %vm367 = vcmp.eq.s32.totalorder %v363, 0
        %vm368 = vcmp.eq.s32.totalorder %v364, 0
        %vm369 = vcmp.eq.s32.totalorder %v365, 0
        %371 = vset.pattern.permute.xlu0 0
        %372 = vperm.xlu0 %371, %v334
        %v373 = vpop.permute.xlu0 %372
        %376 = vset.pattern.permute.xlu0 0
        %377 = vperm.xlu0 %376, %v348
        %v378 = vpop.permute.xlu0 %377
        %v380 = vsel %vm366, %v373, %v378
        %v381 = vsel %vm367, %v373, %v378
        %v382 = vsel %vm368, %v373, %v378
        %v383 = vsel %vm369, %v373, %v378
        %385 = vset.pattern.permute.xlu0 0
        %386 = vperm.xlu0 %385, %v352
        %v387 = vpop.permute.xlu0 %386
        %390 = vset.pattern.permute.xlu0 0
        %391 = vperm.xlu0 %390, %v356
        %v392 = vpop.permute.xlu0 %391
        %v394 = vsel %vm366, %v387, %v392
        %v395 = vsel %vm367, %v387, %v392
        %v396 = vsel %vm368, %v387, %v392
        %v397 = vsel %vm369, %v387, %v392
        %v398 = vld [vmem:[%s198] sm:$0xff]
        %v399 = vld [vmem:[%s198 + $0x8] sm:$0xff]
        %v400 = vld [vmem:[%s198 + $0x10] sm:$0xff]
        %v401 = vld [vmem:[%s198 + $0x18] sm:$0xff]
        %v402 = vld [vmem:[%s198 + $0x20] sm:$0xff]
        %v403 = vld [vmem:[%s198 + $0x28] sm:$0xff]
        %v404 = vld [vmem:[%s198 + $0x30] sm:$0xff]
        %v405 = vld [vmem:[%s198 + $0x38] sm:$0xff]
        %v406 = vmul.f32 %v398, %v380
        %v407 = vmul.f32 %v399, %v381
        %v408 = vmul.f32 %v400, %v382
        %v409 = vmul.f32 %v401, %v383
        %v410 = vmul.f32 %v402, %v380
        %v411 = vmul.f32 %v403, %v381
        %v412 = vmul.f32 %v404, %v382
        %v413 = vmul.f32 %v405, %v383
        %v414 = vadd.f32 %v406, %v394
        %v415 = vadd.f32 %v407, %v395
        %v416 = vadd.f32 %v408, %v396
        %v417 = vadd.f32 %v409, %v397
        %v418 = vadd.f32 %v410, %v394
        %v419 = vadd.f32 %v411, %v395
        %v420 = vadd.f32 %v412, %v396
        %v421 = vadd.f32 %v413, %v397
        %422 = vst [vmem:[%s209] sm:$0xff] %v414
        %423 = vst [vmem:[%s209 + $0x8] sm:$0xff] %v415
        %424 = vst [vmem:[%s209 + $0x10] sm:$0xff] %v416
        %425 = vst [vmem:[%s209 + $0x18] sm:$0xff] %v417
        %426 = vst [vmem:[%s209 + $0x20] sm:$0xff] %v418
        %427 = vst [vmem:[%s209 + $0x28] sm:$0xff] %v419
        %428 = vst [vmem:[%s209 + $0x30] sm:$0xff] %v420
        %429 = vst [vmem:[%s209 + $0x38] sm:$0xff] %v421
      $region40: #{cbatchnorm2d.1} parent=27 // pred_fallthru
        _
      %s430 = smul.u32 %s20, %s19
      %s431 = smul.u32 4, %s430
      %p432 = scmp.lt.s32.totalorder %s18, 0
      %s433 = scalar_select %p432, %s18, 0
      %p434 = scmp.lt.s32.totalorder %s431, 3
      %s435 = scalar_select %p434, %s431, 3
      %s436 = smul.addr %s433, 4
      %s437 = sadd.s32 %s435, %s436
      %s438 = smul.addr %s437, 8
      %s439 = scalar_lea.vmem %s2, %s438
      // Predicated region
      $region41: #{cbatchnorm2d.1} parent=27 // pred_check
        %p440 = pneg %p108
      $region42: #{cbatchnorm2d.1} parent=27 // pred_check_branch
        %442 = sbr.rel (%p440) target = $region44
      $region43: #{cbatchnorm2d.1} parent=27 // pred_region
        %s443 = smul.u32 %s20, %s19
        %s444 = smul.u32 4, %s443
      $region44: #{cbatchnorm2d.1} parent=27 // pred_fallthru
        _
    $region28: #{cbatchnorm2d.1} parent=5 // pred_fallthru
      _
    %p445 = scmp.le.s32.totalorder 2, %s8
    // Predicated region
    $region45: #{cbatchnorm2d.1} parent=5 // pred_check
      %p446 = pneg %p445
    $region46: #{cbatchnorm2d.1} parent=5 // pred_check_branch
      %448 = sbr.rel (%p446) target = $region48
    $region47: #{cbatchnorm2d.1} parent=5 // pred_region
      %s449 = ssub.s32 %s8, 2
      // Predicated region
      $region49: #{cbatchnorm2d.1} parent=47 // pred_check
        %p450 = pneg %p114
      $region50: #{cbatchnorm2d.1} parent=47 // pred_check_branch
        %452 = sbr.rel (%p450) target = $region52
      $region51: #{cbatchnorm2d.1} parent=47 // pred_region
        %s453 = smul.u32 %s23, %s22
        %s454 = smul.u32 4, %s453
        %p455 = scmp.lt.s32.totalorder %s21, 0
        %s456 = scalar_select %p455, %s21, 0
        %p457 = scmp.lt.s32.totalorder %s454, 3
        %s458 = scalar_select %p457, %s454, 3
        %s459 = smul.addr %s456, 4
        %s460 = sadd.s32 %s458, %s459
        %s461 = smul.addr %s460, 8
        %s462 = scalar_lea.vmem %s2, %s461
      $region52: #{cbatchnorm2d.1} parent=47 // pred_fallthru
        _
    $region48: #{cbatchnorm2d.1} parent=5 // pred_fallthru
      _
  $region6: #{cbatchnorm2d.1} parent=0 // loop_footer
    %s12 = sadd.s32 1, %s8
  $region7: #{cbatchnorm2d.1} parent=0 // loop_footer_branch
    %7 = sbr.rel target = $region3
  $region8: #{cbatchnorm2d.1} parent=0 // loop_exit
    _

</llo_original>
